<compile_context>
chip_gen: v7x
topology: tpu7x:2x2x1
jax: 0.10.0
libtpu: 0.0.40
codegen_flags: <defaults>
</compile_context>

<pallas_src>
import jax
import jax.numpy as jnp
from jax.experimental import pallas as pl
from jax.experimental.pallas import tpu as pltpu


def _round_up(x, m):
    return ((x + m - 1) // m) * m


# ----------------------------------------------------------------------------
# Pallas kernel: one (batch, lane-tile) block per grid step.
#   w_ref : (Cout, Cin)        resident weight
#   b_ref : (Cout, 1)          resident bias
#   x_ref : (Cin,  tile)       conv input block  (channels on sublanes)
#   r_ref : (Cout, tile)       output_ref block
#   o_ref : (Cout, tile)       lane-dense output block
# ----------------------------------------------------------------------------
def _ic_kernel(w_ref, b_ref, x_ref, r_ref, o_ref):
    acc = jnp.dot(w_ref[...], x_ref[...], preferred_element_type=jnp.float32)
    acc = acc + b_ref[...]                      # broadcast bias over lanes
    o_ref[...] = r_ref[...] * jnp.tanh(acc)     # EUP tanh + VPU gate


# ----------------------------------------------------------------------------
# Wrapper
# ----------------------------------------------------------------------------
def prepare_params(w4d, b):
    """Hoisted out of the jitted forward: PyTorch (Cout,Cin,1,1) -> (Cout,Cin)."""
    Cout, Cin = w4d.shape[0], w4d.shape[1]
    return {
        "w2d": w4d.reshape(Cout, Cin).astype(jnp.float32),
        "b2d": b.reshape(Cout, 1).astype(jnp.float32),
    }


def information_comm(x, ref, w2d, b2d, *, lane_tile=None):
    """x:(B,Cin,F,T), ref:(B,Cout,F,T) -> (B,Cout,F,T) = ref * tanh(1x1conv(x))."""
    B, Cin, F, T = x.shape
    Cout = w2d.shape[0]
    FT = F * T

    # Lane-axis tile: whole extent when small, capped (multiple of 128) when
    # large so VMEM stays bounded and the DMA pipeline has work to overlap.
    if lane_tile is None:
        lane_tile = FT if FT <= 16384 else 8192
    lane_tile = min(_round_up(lane_tile, 128), _round_up(FT, 128))
    FTp = _round_up(FT, lane_tile)
    n_tiles = FTp // lane_tile

    xf = x.reshape(B, Cin, FT)
    rf = ref.reshape(B, Cout, FT)
    if FTp != FT:  # only pad when the spatial extent is ragged
        xf = jnp.pad(xf, ((0, 0), (0, 0), (0, FTp - FT)))
        rf = jnp.pad(rf, ((0, 0), (0, 0), (0, FTp - FT)))

    out = pl.pallas_call(
        _ic_kernel,
        out_shape=jax.ShapeDtypeStruct((B, Cout, FTp), jnp.float32),
        grid=(B, n_tiles),
        in_specs=[
            pl.BlockSpec((Cout, Cin), lambda b, j: (0, 0)),           # weight (resident)
            pl.BlockSpec((Cout, 1), lambda b, j: (0, 0)),             # bias   (resident)
            pl.BlockSpec((None, Cin, lane_tile), lambda b, j: (b, 0, j)),   # input
            pl.BlockSpec((None, Cout, lane_tile), lambda b, j: (b, 0, j)),  # output_ref
        ],
        out_specs=pl.BlockSpec((None, Cout, lane_tile), lambda b, j: (b, 0, j)),
        compiler_params=pltpu.CompilerParams(
            dimension_semantics=("parallel", "parallel")),            # 2 TCs on v7x
    )(w2d, b2d, xf, rf)

    if FTp != FT:
        out = out[:, :, :FT]
    return out.reshape(B, Cout, F, T)


# ----------------------------------------------------------------------------
# Demo / self-check
# ----------------------------------------------------------------------------
if __name__ == "__main__":
    B, F, T = 2, 16, 16        # F*T = 256 -> single lane-dense tile per batch
    CIN, COUT = 8, 9           # PHASEN phase->amp InformationComm sizes

    key = jax.random.PRNGKey(0)
    kx, kr, kw, kb = jax.random.split(key, 4)
    x = jax.random.normal(kx, (B, CIN, F, T), jnp.float32)       # conv input
    ref = jax.random.normal(kr, (B, COUT, F, T), jnp.float32)    # output_ref
    w4d = 0.1 * jax.random.normal(kw, (COUT, CIN, 1, 1), jnp.float32)
    bias = 0.01 * jax.random.normal(kb, (COUT,), jnp.float32)

    params = prepare_params(w4d, bias)   # weight prep hoisted out of jit

    fwd = jax.jit(information_comm)
    out = fwd(x, ref, params["w2d"], params["b2d"])
    jax.block_until_ready(out)

    # plain-JAX reference: output_ref * tanh(Conv2d_1x1(input))
    expect = ref * jnp.tanh(
        jnp.einsum("oc,bcft->boft", w4d[:, :, 0, 0], x)
        + bias[None, :, None, None]
    )

    assert out.shape == (B, COUT, F, T), out.shape
    assert jnp.all(jnp.isfinite(out))
    assert jnp.allclose(out, expect, atol=1e-5, rtol=1e-5), float(
        jnp.max(jnp.abs(out - expect)))
    print("KERNEL_OK")
</pallas_src>

<mosaic_0001>
module attributes {stable_mosaic.version = 11 : i64} {
  func.func @_ic_kernel(%arg0: i32, %arg1: i32, %arg2: memref<9x8xf32, #tpu.memory_space<vmem>>, %arg3: memref<9x1xf32, #tpu.memory_space<vmem>>, %arg4: memref<1x8x256xf32, #tpu.memory_space<vmem>>, %arg5: memref<1x9x256xf32, #tpu.memory_space<vmem>>, %arg6: memref<1x9x256xf32, #tpu.memory_space<vmem>>) attributes {dimension_semantics = [#tpu.dimension_semantics<parallel>, #tpu.dimension_semantics<parallel>], iteration_bounds = array<i64: 2, 1>, scalar_prefetch = 0 : i64, scratch_operands = 0 : i64, tpu.core_type = #tpu.core_type<tc>, window_params = [{pipeline_mode = #tpu.pipeline_mode<synchronous>, transform_indices = @transform_0, window_bounds = array<i64: 9, 8>}, {pipeline_mode = #tpu.pipeline_mode<synchronous>, transform_indices = @transform_1, window_bounds = array<i64: 9, 1>}, {transform_indices = @transform_2, window_bounds = array<i64: 1, 8, 256>}, {transform_indices = @transform_3, window_bounds = array<i64: 1, 9, 256>}, {transform_indices = @transform_4, window_bounds = array<i64: 1, 9, 256>}]} {
    %c0 = arith.constant 0 : index
    %c0_0 = arith.constant 0 : index
    %0 = vector.load %arg2[%c0, %c0_0] : memref<9x8xf32, #tpu.memory_space<vmem>>, vector<9x8xf32>
    %c0_1 = arith.constant 0 : index
    %c0_2 = arith.constant 0 : index
    %c0_3 = arith.constant 0 : index
    %1 = vector.load %arg4[%c0_1, %c0_2, %c0_3] : memref<1x8x256xf32, #tpu.memory_space<vmem>>, vector<1x8x256xf32>
    %2 = vector.shape_cast %1 : vector<1x8x256xf32> to vector<8x256xf32>
    %cst = arith.constant dense<0.000000e+00> : vector<9x256xf32>
    %3 = tpu.matmul %0, %2, %cst {dimension_numbers = #tpu.dot_dimension_numbers<[1], [0], [0], [1], [0, 0, 1, 1], [], []>} : vector<9x8xf32>, vector<8x256xf32>, vector<9x256xf32> -> vector<9x256xf32>
    %c0_4 = arith.constant 0 : index
    %c0_5 = arith.constant 0 : index
    %4 = vector.load %arg3[%c0_4, %c0_5] : memref<9x1xf32, #tpu.memory_space<vmem>>, vector<9x1xf32>
    %5 = vector.broadcast %4 : vector<9x1xf32> to vector<9x256xf32>
    %6 = arith.addf %3, %5 : vector<9x256xf32>
    %c0_6 = arith.constant 0 : index
    %c0_7 = arith.constant 0 : index
    %c0_8 = arith.constant 0 : index
    %7 = vector.load %arg5[%c0_6, %c0_7, %c0_8] : memref<1x9x256xf32, #tpu.memory_space<vmem>>, vector<1x9x256xf32>
    %8 = vector.shape_cast %7 : vector<1x9x256xf32> to vector<9x256xf32>
    %9 = math.tanh %6 : vector<9x256xf32>
    %10 = arith.mulf %8, %9 : vector<9x256xf32>
    %c0_9 = arith.constant 0 : index
    %c0_10 = arith.constant 0 : index
    %c0_11 = arith.constant 0 : index
    %11 = vector.load %arg6[%c0_9, %c0_10, %c0_11] : memref<1x9x256xf32, #tpu.memory_space<vmem>>, vector<1x9x256xf32>
    %12 = vector.shape_cast %11 : vector<1x9x256xf32> to vector<9x256xf32>
    %13 = vector.shape_cast %10 : vector<9x256xf32> to vector<1x9x256xf32>
    tpu.vector_store %arg6[%c0_9, %c0_10, %c0_11], %13 {strides = array<i32>} : memref<1x9x256xf32, #tpu.memory_space<vmem>>, vector<1x9x256xf32>,
    return
  }
  func.func @transform_0(%arg0: i32, %arg1: i32) -> (i32, i32) {
    %c0_i32 = arith.constant 0 : i32
    %c0_i32_0 = arith.constant 0 : i32
    %c0_i32_1 = arith.constant 0 : i32
    return %c0_i32, %c0_i32_0 : i32, i32
  }
  func.func @transform_1(%arg0: i32, %arg1: i32) -> (i32, i32) {
    %c0_i32 = arith.constant 0 : i32
    %c0_i32_0 = arith.constant 0 : i32
    %c0_i32_1 = arith.constant 0 : i32
    return %c0_i32, %c0_i32_0 : i32, i32
  }
  func.func @transform_2(%arg0: i32, %arg1: i32) -> (i32, i32, i32) {
    %c0_i32 = arith.constant 0 : i32
    %c0_i32_0 = arith.constant 0 : i32
    return %arg0, %c0_i32, %arg1 : i32, i32, i32
  }
  func.func @transform_3(%arg0: i32, %arg1: i32) -> (i32, i32, i32) {
    %c0_i32 = arith.constant 0 : i32
    %c0_i32_0 = arith.constant 0 : i32
    return %arg0, %c0_i32, %arg1 : i32, i32, i32
  }
  func.func @transform_4(%arg0: i32, %arg1: i32) -> (i32, i32, i32) {
    %c0_i32 = arith.constant 0 : i32
    %c0_i32_0 = arith.constant 0 : i32
    return %arg0, %c0_i32, %arg1 : i32, i32, i32
  }
}

</mosaic_0001>

<llo_original>
// kernel: information_comm.1
$region0: #{information_comm.1}
  #allocation0 [shape = 'u32[]', space=smem, size = 0x4, offset = 0x4, fixed_abs, tag = 'smem constant byte address 0x4 - core index']
  #allocation1 [shape = 'u32[144,128]{1,0:T(1,128)}', space=vmem, size = 0x12000, scoped, tag = 'internal scratch']
  %s0 = inlined_call_operand.vmem [shape: f32[9,8], index: 0, kind: input, shape index: {}]
  %s1 = inlined_call_operand.vmem [shape: f32[9,1], index: 1, kind: input, shape index: {}]
  %s2 = inlined_call_operand.vmem [shape: f32[2,8,256], index: 2, kind: input, shape index: {}]
  %s3 = inlined_call_operand.vmem [shape: f32[2,9,256], index: 3, kind: input, shape index: {}]
  %s4 = inlined_call_operand.vmem [shape: f32[2,9,256], index: 4, kind: output, shape index: {}]
  %s5 = sld [smem:[#allocation0]]
  $region49: #{information_comm.1} parent=0
    _
  %s7 = ssub.s32 1, %s5
  %s8 = scalar_select 0, %s7, %s5
  loop: start=0, step=1, limit=4
  $region2: #{information_comm.1} parent=0 // loop_pre_header
    _
  $region3: #{information_comm.1} parent=0 // loop_header
    %s10 = sphi 0, %s14
    %p11 = scmp.ge.s32.totalorder %s10, 4
    %s17 = sphi 0, %s29
    %s18 = sphi 0, %s25
    %s19 = sphi 0, %s17
    %s20 = sphi 0, %s18
    %s21 = sphi 0, %s19
    %s22 = sphi 0, %s20
    %s30 = sphi 0, %s30
    %s32 = sphi 0, %s30
    %s33 = sphi 0, %s32
    %s47 = sphi 0, %s33
    %s51 = sphi 0, %s51
    %s53 = sphi 0, %s51
    %s54 = sphi 0, %s53
    %s68 = sphi 0, %s54
    %s76 = sphi 0, %s78
    %s79 = sphi 0, %s76
    %s80 = sphi 0, %s79
    %s96 = sphi 0, %s80
    %s104 = sphi 0, %s106
    %s107 = sphi 0, %s104
    %s108 = sphi 0, %s107
    %s124 = sphi 0, %s108
    %s132 = sphi 0, %s134
    %s135 = sphi 0, %s132
    %s136 = sphi 0, %s135
    %s152 = sphi 0, %s136
  $region4: #{information_comm.1} parent=0 // loop_header_branch
    %13 = sbr.rel (%p11) target = $region8
  $region5: #{information_comm.1} parent=0 // loop_body
    %s15 = ssub.s32 %s10, 1
    %s16 = ssub.s32 %s10, 2
    %s23 = sadd.s32 1, %s18
    %p24 = scmp.ge.s32.totalorder %s23, 1
    %s25 = scalar_select %p24, 0, %s23
    %s26 = sadd.s32 1, %s17
    %s27 = scalar_select %p24, %s26, %s17
    %p28 = scmp.ge.s32.totalorder %s27, 2
    %s29 = scalar_select %p28, 0, %s27
    %s31 = sadd.s32 %s30, 1
    %p34 = scmp.eq.s32.totalorder %s10, 1
    %p35 = scmp.ne.s32.totalorder %s30, %s32
    %p36 = scmp.eq.s32.totalorder %s10, 0
    %p37 = por %p35, %p36
    %p38 = scmp.ne.s32.totalorder %s30, %s32
    %p39 = scmp.eq.s32.totalorder %s15, 1
    %p40 = por %p38, %p39
    %p41 = scmp.ne.s32.totalorder %s32, %s33
    %p42 = scmp.eq.s32.totalorder %s15, 0
    %p43 = por %p41, %p42
    %p44 = scmp.ne.s32.totalorder %s32, %s33
    %p45 = scmp.eq.s32.totalorder %s16, 1
    %p46 = por %p44, %p45
    %p48 = scmp.ne.s32.totalorder %s33, %s47
    %p49 = scmp.eq.s32.totalorder %s16, 0
    %p50 = por %p48, %p49
    %s52 = sadd.s32 %s51, 1
    %p55 = scmp.eq.s32.totalorder %s10, 1
    %p56 = scmp.ne.s32.totalorder %s51, %s53
    %p57 = scmp.eq.s32.totalorder %s10, 0
    %p58 = por %p56, %p57
    %p59 = scmp.ne.s32.totalorder %s51, %s53
    %p60 = scmp.eq.s32.totalorder %s15, 1
    %p61 = por %p59, %p60
    %p62 = scmp.ne.s32.totalorder %s53, %s54
    %p63 = scmp.eq.s32.totalorder %s15, 0
    %p64 = por %p62, %p63
    %p65 = scmp.ne.s32.totalorder %s53, %s54
    %p66 = scmp.eq.s32.totalorder %s16, 1
    %p67 = por %p65, %p66
    %p69 = scmp.ne.s32.totalorder %s54, %s68
    %p70 = scmp.eq.s32.totalorder %s16, 0
    %p71 = por %p69, %p70
    %s72 = ssub.s32 %s17, %s29
    %s73 = ssub.s32 %s18, %s25
    %s74 = sor.u32 %s72, %s73
    %p75 = scmp.eq.s32.totalorder %s74, 0
    %s77 = sadd.s32 %s76, 1
    %s78 = scalar_select %p75, %s76, %s77
    %p81 = pneg %p75
    %p82 = scmp.eq.s32.totalorder %s10, 1
    %p83 = por %p81, %p82
    %p84 = scmp.ne.s32.totalorder %s76, %s79
    %p85 = scmp.eq.s32.totalorder %s10, 0
    %p86 = por %p84, %p85
    %p87 = scmp.ne.s32.totalorder %s76, %s79
    %p88 = scmp.eq.s32.totalorder %s15, 1
    %p89 = por %p87, %p88
    %p90 = scmp.ne.s32.totalorder %s79, %s80
    %p91 = scmp.eq.s32.totalorder %s15, 0
    %p92 = por %p90, %p91
    %p93 = scmp.ne.s32.totalorder %s79, %s80
    %p94 = scmp.eq.s32.totalorder %s16, 1
    %p95 = por %p93, %p94
    %p97 = scmp.ne.s32.totalorder %s80, %s96
    %p98 = scmp.eq.s32.totalorder %s16, 0
    %p99 = por %p97, %p98
    %s100 = ssub.s32 %s17, %s29
    %s101 = ssub.s32 %s18, %s25
    %s102 = sor.u32 %s100, %s101
    %p103 = scmp.eq.s32.totalorder %s102, 0
    %s105 = sadd.s32 %s104, 1
    %s106 = scalar_select %p103, %s104, %s105
    %p109 = pneg %p103
    %p110 = scmp.eq.s32.totalorder %s10, 1
    %p111 = por %p109, %p110
    %p112 = scmp.ne.s32.totalorder %s104, %s107
    %p113 = scmp.eq.s32.totalorder %s10, 0
    %p114 = por %p112, %p113
    %p115 = scmp.ne.s32.totalorder %s104, %s107
    %p116 = scmp.eq.s32.totalorder %s15, 1
    %p117 = por %p115, %p116
    %p118 = scmp.ne.s32.totalorder %s107, %s108
    %p119 = scmp.eq.s32.totalorder %s15, 0
    %p120 = por %p118, %p119
    %p121 = scmp.ne.s32.totalorder %s107, %s108
    %p122 = scmp.eq.s32.totalorder %s16, 1
    %p123 = por %p121, %p122
    %p125 = scmp.ne.s32.totalorder %s108, %s124
    %p126 = scmp.eq.s32.totalorder %s16, 0
    %p127 = por %p125, %p126
    %s128 = ssub.s32 %s17, %s29
    %s129 = ssub.s32 %s18, %s25
    %s130 = sor.u32 %s128, %s129
    %p131 = scmp.eq.s32.totalorder %s130, 0
    %s133 = sadd.s32 %s132, 1
    %s134 = scalar_select %p131, %s132, %s133
    %p137 = pneg %p131
    %p138 = scmp.eq.s32.totalorder %s10, 1
    %p139 = por %p137, %p138
    %p140 = scmp.ne.s32.totalorder %s132, %s135
    %p141 = scmp.eq.s32.totalorder %s10, 0
    %p142 = por %p140, %p141
    %p143 = scmp.ne.s32.totalorder %s132, %s135
    %p144 = scmp.eq.s32.totalorder %s15, 1
    %p145 = por %p143, %p144
    %p146 = scmp.ne.s32.totalorder %s135, %s136
    %p147 = scmp.eq.s32.totalorder %s15, 0
    %p148 = por %p146, %p147
    %p149 = scmp.ne.s32.totalorder %s135, %s136
    %p150 = scmp.eq.s32.totalorder %s16, 1
    %p151 = por %p149, %p150
    %p153 = scmp.ne.s32.totalorder %s136, %s152
    %p154 = scmp.eq.s32.totalorder %s16, 0
    %p155 = por %p153, %p154
    %p156 = scmp.le.s32.totalorder 1, %s10
    %p157 = scmp.lt.s32.totalorder %s10, 3
    %p158 = pnand %p156, %p157
    %p159 = pneg %p158
    // Predicated region
    $region9: #{information_comm.1} parent=5 // pred_check
      _
    $region10: #{information_comm.1} parent=5 // pred_check_branch
      %161 = sbr.rel (%p158) target = $region12
    $region11: #{information_comm.1} parent=5 // pred_region
      %s162 = ssub.s32 %s10, 1
      // Predicated region
      $region13: #{information_comm.1} parent=11 // pred_check
        %p163 = pneg %p43
      $region14: #{information_comm.1} parent=11 // pred_check_branch
        %165 = sbr.rel (%p163) target = $region16
      $region15: #{information_comm.1} parent=11 // pred_region
        _
      $region16: #{information_comm.1} parent=11 // pred_fallthru
        _
      // Predicated region
      $region17: #{information_comm.1} parent=11 // pred_check
        %p166 = pneg %p64
      $region18: #{information_comm.1} parent=11 // pred_check_branch
        %168 = sbr.rel (%p166) target = $region20
      $region19: #{information_comm.1} parent=11 // pred_region
        _
      $region20: #{information_comm.1} parent=11 // pred_fallthru
        _
    $region12: #{information_comm.1} parent=5 // pred_fallthru
      _
    %p169 = scmp.lt.s32.totalorder %s10, 2
    // Predicated region
    $region21: #{information_comm.1} parent=5 // pred_check
      %p170 = pneg %p169
    $region22: #{information_comm.1} parent=5 // pred_check_branch
      %172 = sbr.rel (%p170) target = $region24
    $region23: #{information_comm.1} parent=5 // pred_region
      // Predicated region
      $region25: #{information_comm.1} parent=23 // pred_check
        %p173 = pneg %p86
      $region26: #{information_comm.1} parent=23 // pred_check_branch
        %175 = sbr.rel (%p173) target = $region28
      $region27: #{information_comm.1} parent=23 // pred_region
        %s176 = smul.u32 2, %s18
        %p177 = scmp.lt.s32.totalorder %s17, 1
        %s178 = scalar_select %p177, %s17, 1
        %p179 = scmp.lt.s32.totalorder %s176, 1
        %s180 = scalar_select %p179, %s176, 1
        %s181 = smul.addr %s178, 2
        %s182 = sadd.s32 %s180, %s181
        %s183 = smul.addr %s182, 8
        %s184 = scalar_lea.vmem %s2, %s183
        %s185 = smul.u32 2, %s18
      $region28: #{information_comm.1} parent=23 // pred_fallthru
        _
      // Predicated region
      $region29: #{information_comm.1} parent=23 // pred_check
        %p186 = pneg %p114
      $region30: #{information_comm.1} parent=23 // pred_check_branch
        %188 = sbr.rel (%p186) target = $region32
      $region31: #{information_comm.1} parent=23 // pred_region
        %s189 = smul.u32 2, %s18
        %p190 = scmp.lt.s32.totalorder %s17, 1
        %s191 = scalar_select %p190, %s17, 1
        %p192 = scmp.lt.s32.totalorder %s189, 1
        %s193 = scalar_select %p192, %s189, 1
        %s194 = smul.addr %s191, 4
        %s195 = sadd.s32 %s193, %s194
        %s196 = smul.addr %s195, 8
        %s197 = scalar_lea.vmem %s3, %s196
        %s198 = smul.u32 2, %s18
      $region32: #{information_comm.1} parent=23 // pred_fallthru
        _
    $region24: #{information_comm.1} parent=5 // pred_fallthru
      _
    %p199 = scmp.le.s32.totalorder 1, %s10
    %p200 = scmp.lt.s32.totalorder %s10, 3
    %p201 = pnand %p199, %p200
    %p202 = pneg %p201
    // Predicated region
    $region33: #{information_comm.1} parent=5 // pred_check
      _
    $region34: #{information_comm.1} parent=5 // pred_check_branch
      %204 = sbr.rel (%p201) target = $region36
    $region35: #{information_comm.1} parent=5 // pred_region
      %s205 = ssub.s32 %s10, 1
      %p206 = pneg %p43
      %p207 = pneg %p40
      %p208 = pneg %p64
      %p209 = pneg %p61
      %s210 = smul.u32 2, %s20
      %p211 = scmp.lt.s32.totalorder %s19, 1
      %s212 = scalar_select %p211, %s19, 1
      %p213 = scmp.lt.s32.totalorder %s210, 1
      %s214 = scalar_select %p213, %s210, 1
      %s215 = smul.addr %s212, 2
      %s216 = sadd.s32 %s214, %s215
      %s217 = smul.addr %s216, 8
      %s218 = scalar_lea.vmem %s2, %s217
      %p219 = pneg %p92
      %p220 = pneg %p89
      %s221 = smul.u32 2, %s20
      %p222 = scmp.lt.s32.totalorder %s19, 1
      %s223 = scalar_select %p222, %s19, 1
      %p224 = scmp.lt.s32.totalorder %s221, 1
      %s225 = scalar_select %p224, %s221, 1
      %s226 = smul.addr %s223, 4
      %s227 = sadd.s32 %s225, %s226
      %s228 = smul.addr %s227, 8
      %s229 = scalar_lea.vmem %s3, %s228
      %p230 = pneg %p120
      %p231 = pneg %p117
      %p232 = pneg %p148
      %p233 = pneg %p145
      %s234 = smul.u32 2, %s20
      %p235 = scmp.lt.s32.totalorder %s19, 1
      %s236 = scalar_select %p235, %s19, 1
      %p237 = scmp.lt.s32.totalorder %s234, 1
      %s238 = scalar_select %p237, %s234, 1
      %s239 = smul.addr %s236, 4
      %s240 = sadd.s32 %s238, %s239
      %s241 = smul.addr %s240, 8
      %s242 = scalar_lea.vmem %s4, %s241
      %s243 = smul.u32 2, %s20
      %p244 = scmp.lt.s32.totalorder %s19, 1
      %s245 = scalar_select %p244, %s19, 1
      %p246 = scmp.lt.s32.totalorder %s243, 1
      %s247 = scalar_select %p246, %s243, 1
      %s248 = smul.addr %s245, 2
      %s249 = sadd.s32 %s247, %s248
      %s250 = smul.addr %s249, 8
      %s251 = scalar_lea.vmem %s2, %s250
      %s252 = smul.u32 2, %s20
      %s253 = smul.u32 2, %s20
      %p254 = scmp.lt.s32.totalorder %s19, 1
      %s255 = scalar_select %p254, %s19, 1
      %p256 = scmp.lt.s32.totalorder %s253, 1
      %s257 = scalar_select %p256, %s253, 1
      %s258 = smul.addr %s255, 4
      %s259 = sadd.s32 %s257, %s258
      %s260 = smul.addr %s259, 8
      %s261 = scalar_lea.vmem %s3, %s260
      %s262 = smul.u32 2, %s20
      %s263 = smul.u32 2, %s20
      %p264 = scmp.lt.s32.totalorder %s19, 1
      %s265 = scalar_select %p264, %s19, 1
      %p266 = scmp.lt.s32.totalorder %s263, 1
      %s267 = scalar_select %p266, %s263, 1
      %s268 = smul.addr %s265, 4
      %s269 = sadd.s32 %s267, %s268
      %s270 = smul.addr %s269, 8
      %s271 = scalar_lea.vmem %s4, %s270
      %s272 = smul.u32 2, %s20
      %v273 = vld [vmem:[%s0] sm:$0xff]
      %v274 = vld [vmem:[%s0 + $0x8] sm:$0x1]
      %v275 = vld [vmem:[%s251] sm:$0xff]
      %v276 = vld [vmem:[%s251 + $0x8] sm:$0xff]
      %v277 = vld [vmem:[%s1] sm:$0xff]
      %v278 = vld [vmem:[%s1 + $0x8] sm:$0x1]
      %280 = vset.pattern.permute.xlu0 0
      %281 = vperm.xlu0 %280, %v277
      %v282 = vpop.permute.xlu0 %281
      %285 = vset.pattern.permute.xlu0 0
      %286 = vperm.xlu0 %285, %v278
      %v287 = vpop.permute.xlu0 %286
      %vm289 = vcmask 64512
      %v291 = vsel %vm289, %v273, 0
      %v294 = vsel %vm289, %v274, 0
      %296 = vmatprep.subr.mxu0 %v276
      %297 = vmatpush1.msra.mxu0 %v275
      %298 = vmatprep.subr.mxu0 0.0
      %299 = vmatpush1.msra.mxu0 0.0
      %300 = vmatprep.subr.mxu0 0.0
      %301 = vmatpush1.msra.mxu0 0.0
      %302 = vmatprep.subr.mxu0 0.0
      %303 = vmatpush1.msra.mxu0 0.0
      %304 = vmatprep.subr.mxu0 0.0
      %305 = vmatpush1.msra.mxu0 0.0
      %306 = vmatprep.subr.mxu0 0.0
      %307 = vmatpush1.msra.mxu0 0.0
      %308 = vmatprep.subr.mxu0 0.0
      %309 = vmatpush1.msra.mxu0 0.0
      %310 = vmatprep.subr.mxu0 0.0
      %311 = vmatpush1.msra.mxu0 0.0
      %312 = vmatprep.subr.mxu0 0.0
      %313 = vmatpush1.msra.mxu0 0.0
      %314 = vmatprep.subr.mxu0 0.0
      %315 = vmatpush1.msra.mxu0 0.0
      %316 = vmatprep.subr.mxu0 0.0
      %317 = vmatpush1.msra.mxu0 0.0
      %318 = vmatprep.subr.mxu0 0.0
      %319 = vmatpush1.msra.mxu0 0.0
      %320 = vmatprep.subr.mxu0 0.0
      %321 = vmatpush1.msra.mxu0 0.0
      %322 = vmatprep.subr.mxu0 0.0
      %323 = vmatpush1.msra.mxu0 0.0
      %324 = vmatprep.subr.mxu0 0.0
      %325 = vmatpush1.msra.mxu0 0.0
      %326 = vmatprep.subr.mxu0 0.0
      %327 = vmatpush1.msra.mxu0 0.0
      %328 = vmatprep.subr.mxu0 0.0
      %329 = vmatpush1.msra.mxu0 0.0
      %330 = vmatprep.subr.mxu0 0.0
      %331 = vmatpush1.msra.mxu0 0.0
      %332 = vmatprep.subr.mxu0 0.0
      %333 = vmatpush1.msra.mxu0 0.0
      %334 = vmatprep.subr.mxu0 0.0
      %335 = vmatpush1.msra.mxu0 0.0
      %336 = vmatprep.subr.mxu0 0.0
      %337 = vmatpush1.msra.mxu0 0.0
      %338 = vmatprep.subr.mxu0 0.0
      %339 = vmatpush1.msra.mxu0 0.0
      %340 = vmatprep.subr.mxu0 0.0
      %341 = vmatpush1.msra.mxu0 0.0
      %342 = vmatprep.subr.mxu0 0.0
      %343 = vmatpush1.msra.mxu0 0.0
      %344 = vmatprep.subr.mxu0 0.0
      %345 = vmatpush1.msra.mxu0 0.0
      %346 = vmatprep.subr.mxu0 0.0
      %347 = vmatpush1.msra.mxu0 0.0
      %348 = vmatprep.subr.mxu0 0.0
      %349 = vmatpush1.msra.mxu0 0.0
      %350 = vmatprep.subr.mxu0 0.0
      %351 = vmatpush1.msra.mxu0 0.0
      %352 = vmatprep.subr.mxu0 0.0
      %353 = vmatpush1.msra.mxu0 0.0
      %354 = vmatprep.subr.mxu0 0.0
      %355 = vmatpush1.msra.mxu0 0.0
      %356 = vmatprep.subr.mxu0 0.0
      %357 = vmatpush1.msra.mxu0 0.0
      %358 = vmatprep.subr.mxu0 0.0
      %359 = vmatpush1.msra.mxu0 0.0
      %360 = vmatprep.mubr.f32.mxu0 0.0
      %361 = vmatmul.mubr.f32.gmra.mrb[0].mxu0 %v291
      %v362 = vpop.f32.mrb[0].mxu0
      %v363 = vadd.f32 %v282, %v362
      %v364 = vpop.f32.mrb[0].mxu0
      %v365 = vadd.f32 %v282, %v364
      %366 = vmatprep.mubr.f32.mxu0 0.0
      %367 = vmatmul.mubr.f32.gmra.mrb[0].mxu0 %v294
      %v368 = vpop.f32.mrb[0].mxu0
      %v369 = vadd.f32 %v287, %v368
      %v370 = vpop.f32.mrb[0].mxu0
      %v371 = vadd.f32 %v287, %v370
      %372 = vdwg.mxu0
      %v373 = vld [vmem:[%s261] sm:$0xff]
      %v374 = vld [vmem:[%s261 + $0x8] sm:$0xff]
      %v375 = vld [vmem:[%s261 + $0x10] sm:$0x1]
      %v376 = vld [vmem:[%s261 + $0x18] sm:$0x1]
      %v377 = vtanh.pop %v363
      %v378 = vtanh.pop %v365
      %v379 = vtanh.pop %v369
      %v380 = vtanh.pop %v371
      %v381 = vmul.f32 %v373, %v377
      %v382 = vmul.f32 %v374, %v378
      %v383 = vmul.f32 %v375, %v379
      %v384 = vmul.f32 %v376, %v380
      %385 = vst [vmem:[%s271] sm:$0xff] %v381
      %386 = vst [vmem:[%s271 + $0x8] sm:$0xff] %v382
      %387 = vst [vmem:[%s271 + $0x10] sm:$0x1] %v383
      %388 = vst [vmem:[%s271 + $0x18] sm:$0x1] %v384
      %s389 = smul.u32 2, %s20
      %p390 = scmp.lt.s32.totalorder %s19, 1
      %s391 = scalar_select %p390, %s19, 1
      %p392 = scmp.lt.s32.totalorder %s389, 1
      %s393 = scalar_select %p392, %s389, 1
      %s394 = smul.addr %s391, 4
      %s395 = sadd.s32 %s393, %s394
      %s396 = smul.addr %s395, 8
      %s397 = scalar_lea.vmem %s4, %s396
      // Predicated region
      $region37: #{information_comm.1} parent=35 // pred_check
        %p398 = pneg %p145
      $region38: #{information_comm.1} parent=35 // pred_check_branch
        %400 = sbr.rel (%p398) target = $region40
      $region39: #{information_comm.1} parent=35 // pred_region
        %s401 = smul.u32 2, %s20
      $region40: #{information_comm.1} parent=35 // pred_fallthru
        _
    $region36: #{information_comm.1} parent=5 // pred_fallthru
      _
    %p402 = scmp.le.s32.totalorder 2, %s10
    // Predicated region
    $region41: #{information_comm.1} parent=5 // pred_check
      %p403 = pneg %p402
    $region42: #{information_comm.1} parent=5 // pred_check_branch
      %405 = sbr.rel (%p403) target = $region44
    $region43: #{information_comm.1} parent=5 // pred_region
      %s406 = ssub.s32 %s10, 2
      // Predicated region
      $region45: #{information_comm.1} parent=43 // pred_check
        %p407 = pneg %p151
      $region46: #{information_comm.1} parent=43 // pred_check_branch
        %409 = sbr.rel (%p407) target = $region48
      $region47: #{information_comm.1} parent=43 // pred_region
        %s410 = smul.u32 2, %s22
        %p411 = scmp.lt.s32.totalorder %s21, 1
        %s412 = scalar_select %p411, %s21, 1
        %p413 = scmp.lt.s32.totalorder %s410, 1
        %s414 = scalar_select %p413, %s410, 1
        %s415 = smul.addr %s412, 4
        %s416 = sadd.s32 %s414, %s415
        %s417 = smul.addr %s416, 8
        %s418 = scalar_lea.vmem %s4, %s417
      $region48: #{information_comm.1} parent=43 // pred_fallthru
        _
    $region44: #{information_comm.1} parent=5 // pred_fallthru
      _
  $region6: #{information_comm.1} parent=0 // loop_footer
    %s14 = sadd.s32 1, %s10
  $region7: #{information_comm.1} parent=0 // loop_footer_branch
    %9 = sbr.rel target = $region3
  $region8: #{information_comm.1} parent=0 // loop_exit
    _

</llo_original>
